<compile_context>
chip_gen: v5e
topology: v5e:2x2
jax: 0.10.0
libtpu: 0.0.40
codegen_flags: <defaults>
</compile_context>

<pallas_src>
import jax
import jax.numpy as jnp
from jax.experimental import pallas as pl
from jax.experimental.pallas import tpu as pltpu

HIDDEN = 128


def critic_kernel(x_ref, w1_ref, b1_ref, w2_ref, b2_ref, w3t_ref, b3_ref, o_ref):
    """One batch tile of the fused MLP.

    x_ref   : [TB, obs_dim]  fp32
    w1_ref  : [obs_dim, 128] bf16  (VMEM-resident)
    b1_ref  : [1, 128]       fp32
    w2_ref  : [128, 128]     bf16  (VMEM-resident)
    b2_ref  : [1, 128]       fp32
    w3t_ref : [1, 128]       fp32  (value-head weight, pre-transposed)
    b3_ref  : [1, 1]         fp32  (SMEM scalar)
    o_ref   : [1, TB]        fp32  (lane-dense output row)
    """
    # Layer 1: [TB, obs_dim] @ [obs_dim, 128]  (bf16 MXU inputs, fp32 accumulate)
    h1 = jnp.dot(x_ref[...].astype(jnp.bfloat16), w1_ref[...],
                 preferred_element_type=jnp.float32)
    h1 = jnp.maximum(h1 + b1_ref[...], 0.0)

    # Layer 2: [TB, 128] @ [128, 128]  (bf16 MXU inputs, fp32 accumulate)
    h2 = jnp.dot(h1.astype(jnp.bfloat16), w2_ref[...],
                 preferred_element_type=jnp.float32)
    h2 = jnp.maximum(h2 + b2_ref[...], 0.0)

    # Value head (out_features == 1) on the MXU, contracting the last dims of
    # both operands (the standard "q @ k.T" / transpose_rhs matmul pattern).
    # Result is produced directly as a lane-dense [1, TB] row, so the output
    # store is dense vst's instead of TB/8 masked column stores.
    v = jax.lax.dot_general(
        w3t_ref[...], h2,
        dimension_numbers=(((1,), (1,)), ((), ())),
        preferred_element_type=jnp.float32)            # [1, TB] fp32

    o_ref[...] = (v + b3_ref[0, 0]).astype(o_ref.dtype)


def _pick_batch_tile(batch, max_tile):
    """Pick the batch-tile size.

    * As large as possible (grid-step overhead ~0.35 us dominates small tiles).
    * Multiples of 8 whenever the tile doesn't cover the whole batch.
    * For batch >= 2048, split into >= 2 tiles so v7x's 2 TensorCores both get
      work (the batch axis is the only parallelism).
    """
    max_tile = max(8, (max_tile // 8) * 8)
    if batch > max_tile:
        return max_tile
    if batch >= 2048:
        half = (batch + 1) // 2
        return ((half + 7) // 8) * 8
    return batch  # full batch in one block: full-dim blocks are always legal


def critic_forward(x, params, *, max_batch_tile=4096):
    """x: [B, obs_dim] float32 -> [B, 1] float32."""
    w1, b1, w2, b2, w3, b3 = params
    B, obs_dim = x.shape

    # bf16 weights for the MXU layers; the value-head weight stays fp32
    # (MXU has huge slack, keeps closer fp32 parity) and is pre-transposed.
    w1b = w1.astype(jnp.bfloat16)
    w2b = w2.astype(jnp.bfloat16)
    w3t = w3.T  # [1, 128] fp32

    tb = _pick_batch_tile(B, max_batch_tile)
    num_tiles = pl.cdiv(B, tb)

    flops = 2 * B * (obs_dim * HIDDEN + HIDDEN * HIDDEN + HIDDEN)
    bytes_accessed = (x.size * 4 + w1b.size * 2 + w2b.size * 2 + w3t.size * 4
                      + b1.size * 4 + b2.size * 4 + 4 + B * 4)

    out = pl.pallas_call(
        critic_kernel,
        out_shape=jax.ShapeDtypeStruct((num_tiles, 1, tb), jnp.float32),
        grid=(num_tiles,),
        in_specs=[
            pl.BlockSpec((tb, obs_dim), lambda i: (i, 0)),       # x (batch-tiled)
            pl.BlockSpec((obs_dim, HIDDEN), lambda i: (0, 0)),   # w1 (resident)
            pl.BlockSpec((1, HIDDEN), lambda i: (0, 0)),         # b1
            pl.BlockSpec((HIDDEN, HIDDEN), lambda i: (0, 0)),    # w2 (resident)
            pl.BlockSpec((1, HIDDEN), lambda i: (0, 0)),         # b2
            pl.BlockSpec((1, HIDDEN), lambda i: (0, 0)),         # w3^T
            pl.BlockSpec(memory_space=pltpu.MemorySpace.SMEM),   # b3 scalar
        ],
        # Lane-dense output: each grid step writes one dense (1, tb) row.
        out_specs=pl.BlockSpec((None, 1, tb), lambda i: (i, 0, 0)),
        compiler_params=pltpu.CompilerParams(
            dimension_semantics=("parallel",),   # v7x: shard batch across 2 TCs
            vmem_limit_bytes=32 * 1024 * 1024,   # safe on v7x's 64 MiB VMEM
        ),
        cost_estimate=pl.CostEstimate(
            flops=flops, transcendentals=0, bytes_accessed=bytes_accessed),
    )(x, w1b, b1, w2b, b2, w3t, b3)

    # (num_tiles, 1, tb) lane-dense rows -> (B, 1) column.  Row b lives at flat
    # index b; slicing drops the padded tail of a ragged last tile.
    return out.reshape(num_tiles * tb)[:B].reshape(B, 1)


def init_params(key, obs_dim, hidden=HIDDEN):
    """Deterministic synthetic init (PyTorch-Linear-style uniform bounds)."""
    ks = jax.random.split(key, 6)

    def uniform(k, shape, fan_in):
        bound = 1.0 / jnp.sqrt(fan_in)
        return jax.random.uniform(k, shape, jnp.float32, -bound, bound)

    w1 = uniform(ks[0], (obs_dim, hidden), obs_dim)
    b1 = uniform(ks[1], (1, hidden), obs_dim)
    w2 = uniform(ks[2], (hidden, hidden), hidden)
    b2 = uniform(ks[3], (1, hidden), hidden)
    w3 = uniform(ks[4], (hidden, 1), hidden)
    b3 = uniform(ks[5], (1, 1), hidden)
    return (w1, b1, w2, b2, w3, b3)


def critic_reference_matched(x, params):
    """Reference with the same bf16-in / fp32-acc mixed precision as the kernel."""
    w1, b1, w2, b2, w3, b3 = params
    h1 = jnp.maximum(
        jnp.dot(x.astype(jnp.bfloat16), w1.astype(jnp.bfloat16),
                preferred_element_type=jnp.float32) + b1, 0.0)
    h2 = jnp.maximum(
        jnp.dot(h1.astype(jnp.bfloat16), w2.astype(jnp.bfloat16),
                preferred_element_type=jnp.float32) + b2, 0.0)
    return jnp.dot(h2, w3, preferred_element_type=jnp.float32) + b3


def critic_reference_fp32(x, params):
    """Pure fp32 reference matching the PyTorch module exactly."""
    w1, b1, w2, b2, w3, b3 = params
    h1 = jnp.maximum(x @ w1 + b1, 0.0)
    h2 = jnp.maximum(h1 @ w2 + b2, 0.0)
    return h2 @ w3 + b3


if __name__ == "__main__":
    key = jax.random.PRNGKey(0)
    k_x, k_p, k_x2 = jax.random.split(key, 3)

    # Small shapes consistent with the module.
    B, OBS_DIM = 8, 32
    x = jax.random.normal(k_x, (B, OBS_DIM), dtype=jnp.float32)
    params = init_params(k_p, OBS_DIM)

    out = critic_forward(x, params)
    out = jax.block_until_ready(out)
    assert out.shape == (B, 1)

    # Check against a reference with identical mixed precision.
    ref_matched = critic_reference_matched(x, params)
    assert jnp.allclose(out, ref_matched, atol=2e-3, rtol=2e-3)

    # Sanity check against the pure fp32 PyTorch-equivalent forward.
    ref_fp32 = critic_reference_fp32(x, params)
    assert jnp.allclose(out, ref_fp32, atol=5e-2, rtol=5e-2)

    # Exercise the multi-tile / ragged-last-tile / lane-dense-output path.
    B2 = 2500
    x2 = jax.random.normal(k_x2, (B2, OBS_DIM), dtype=jnp.float32)
    out2 = jax.block_until_ready(critic_forward(x2, params))
    assert out2.shape == (B2, 1)
    assert jnp.allclose(out2, critic_reference_matched(x2, params),
                        atol=2e-3, rtol=2e-3)
    assert jnp.allclose(out2, critic_reference_fp32(x2, params),
                        atol=5e-2, rtol=5e-2)

    print("KERNEL_OK")
</pallas_src>

<mosaic_0001>
module attributes {stable_mosaic.version = 11 : i64} {
  func.func @critic_kernel(%arg0: i32, %arg1: memref<8x32xf32, #tpu.memory_space<vmem>>, %arg2: memref<32x128xbf16, #tpu.memory_space<vmem>>, %arg3: memref<1x128xf32, #tpu.memory_space<vmem>>, %arg4: memref<128x128xbf16, #tpu.memory_space<vmem>>, %arg5: memref<1x128xf32, #tpu.memory_space<vmem>>, %arg6: memref<1x128xf32, #tpu.memory_space<vmem>>, %arg7: memref<1x1xf32, #tpu.memory_space<smem>>, %arg8: memref<1x1x8xf32, #tpu.memory_space<vmem>>) attributes {dimension_semantics = [#tpu.dimension_semantics<parallel>], iteration_bounds = array<i64: 1>, scalar_prefetch = 0 : i64, scratch_operands = 0 : i64, tpu.core_type = #tpu.core_type<tc>, window_params = [{transform_indices = @transform_0, window_bounds = array<i64: 8, 32>}, {pipeline_mode = #tpu.pipeline_mode<synchronous>, transform_indices = @transform_1, window_bounds = array<i64: 32, 128>}, {pipeline_mode = #tpu.pipeline_mode<synchronous>, transform_indices = @transform_2, window_bounds = array<i64: 1, 128>}, {pipeline_mode = #tpu.pipeline_mode<synchronous>, transform_indices = @transform_3, window_bounds = array<i64: 128, 128>}, {pipeline_mode = #tpu.pipeline_mode<synchronous>, transform_indices = @transform_4, window_bounds = array<i64: 1, 128>}, {pipeline_mode = #tpu.pipeline_mode<synchronous>, transform_indices = @transform_5, window_bounds = array<i64: 1, 128>}, {transform_indices = @transform_6, window_bounds = array<i64: 1, 1>}, {transform_indices = @transform_7, window_bounds = array<i64: 1, 1, 8>}]} {
    %c0 = arith.constant 0 : index
    %c0_0 = arith.constant 0 : index
    %0 = vector.load %arg1[%c0, %c0_0] : memref<8x32xf32, #tpu.memory_space<vmem>>, vector<8x32xf32>
    %1 = arith.truncf %0 : vector<8x32xf32> to vector<8x32xbf16>
    %c0_1 = arith.constant 0 : index
    %c0_2 = arith.constant 0 : index
    %2 = vector.load %arg2[%c0_1, %c0_2] : memref<32x128xbf16, #tpu.memory_space<vmem>>, vector<32x128xbf16>
    %cst = arith.constant dense<0.000000e+00> : vector<8x128xf32>
    %3 = tpu.matmul %1, %2, %cst {dimension_numbers = #tpu.dot_dimension_numbers<[1], [0], [0], [1], [0, 0, 1, 1], [], []>} : vector<8x32xbf16>, vector<32x128xbf16>, vector<8x128xf32> -> vector<8x128xf32>
    %c0_3 = arith.constant 0 : index
    %c0_4 = arith.constant 0 : index
    %4 = vector.load %arg3[%c0_3, %c0_4] : memref<1x128xf32, #tpu.memory_space<vmem>>, vector<1x128xf32>
    %5 = vector.broadcast %4 : vector<1x128xf32> to vector<8x128xf32>
    %6 = arith.addf %3, %5 : vector<8x128xf32>
    %cst_5 = arith.constant 0.000000e+00 : f32
    %7 = vector.broadcast %cst_5 : f32 to vector<8x128xf32>
    %8 = arith.maximumf %6, %7 : vector<8x128xf32>
    %9 = arith.truncf %8 : vector<8x128xf32> to vector<8x128xbf16>
    %c0_6 = arith.constant 0 : index
    %c0_7 = arith.constant 0 : index
    %10 = vector.load %arg4[%c0_6, %c0_7] : memref<128x128xbf16, #tpu.memory_space<vmem>>, vector<128x128xbf16>
    %cst_8 = arith.constant dense<0.000000e+00> : vector<8x128xf32>
    %11 = tpu.matmul %9, %10, %cst_8 {dimension_numbers = #tpu.dot_dimension_numbers<[1], [0], [0], [1], [0, 0, 1, 1], [], []>} : vector<8x128xbf16>, vector<128x128xbf16>, vector<8x128xf32> -> vector<8x128xf32>
    %c0_9 = arith.constant 0 : index
    %c0_10 = arith.constant 0 : index
    %12 = vector.load %arg5[%c0_9, %c0_10] : memref<1x128xf32, #tpu.memory_space<vmem>>, vector<1x128xf32>
    %13 = vector.broadcast %12 : vector<1x128xf32> to vector<8x128xf32>
    %14 = arith.addf %11, %13 : vector<8x128xf32>
    %cst_11 = arith.constant 0.000000e+00 : f32
    %15 = vector.broadcast %cst_11 : f32 to vector<8x128xf32>
    %16 = arith.maximumf %14, %15 : vector<8x128xf32>
    %c0_12 = arith.constant 0 : index
    %c0_13 = arith.constant 0 : index
    %17 = vector.load %arg6[%c0_12, %c0_13] : memref<1x128xf32, #tpu.memory_space<vmem>>, vector<1x128xf32>
    %cst_14 = arith.constant dense<0.000000e+00> : vector<1x8xf32>
    %18 = tpu.matmul %17, %16, %cst_14 {dimension_numbers = #tpu.dot_dimension_numbers<[1], [1], [0], [0], [0, 0, 1, 0], [], []>} : vector<1x128xf32>, vector<8x128xf32>, vector<1x8xf32> -> vector<1x8xf32>
    %c0_15 = arith.constant 0 : index
    %c0_16 = arith.constant 0 : index
    %19 = memref.load %arg7[%c0_15, %c0_16] : memref<1x1xf32, #tpu.memory_space<smem>>
    %20 = vector.broadcast %19 : f32 to vector<1x8xf32>
    %21 = arith.addf %18, %20 : vector<1x8xf32>
    %c0_17 = arith.constant 0 : index
    %c0_18 = arith.constant 0 : index
    %c0_19 = arith.constant 0 : index
    %22 = vector.load %arg8[%c0_17, %c0_18, %c0_19] : memref<1x1x8xf32, #tpu.memory_space<vmem>>, vector<1x1x8xf32>
    %23 = vector.shape_cast %22 : vector<1x1x8xf32> to vector<1x8xf32>
    %24 = vector.shape_cast %21 : vector<1x8xf32> to vector<1x1x8xf32>
    tpu.vector_store %arg8[%c0_17, %c0_18, %c0_19], %24 {strides = array<i32>} : memref<1x1x8xf32, #tpu.memory_space<vmem>>, vector<1x1x8xf32>,
    return
  }
  func.func @transform_0(%arg0: i32) -> (i32, i32) {
    %c0_i32 = arith.constant 0 : i32
    %c0_i32_0 = arith.constant 0 : i32
    return %arg0, %c0_i32 : i32, i32
  }
  func.func @transform_1(%arg0: i32) -> (i32, i32) {
    %c0_i32 = arith.constant 0 : i32
    %c0_i32_0 = arith.constant 0 : i32
    %c0_i32_1 = arith.constant 0 : i32
    return %c0_i32, %c0_i32_0 : i32, i32
  }
  func.func @transform_2(%arg0: i32) -> (i32, i32) {
    %c0_i32 = arith.constant 0 : i32
    %c0_i32_0 = arith.constant 0 : i32
    %c0_i32_1 = arith.constant 0 : i32
    return %c0_i32, %c0_i32_0 : i32, i32
  }
  func.func @transform_3(%arg0: i32) -> (i32, i32) {
    %c0_i32 = arith.constant 0 : i32
    %c0_i32_0 = arith.constant 0 : i32
    %c0_i32_1 = arith.constant 0 : i32
    return %c0_i32, %c0_i32_0 : i32, i32
  }
  func.func @transform_4(%arg0: i32) -> (i32, i32) {
    %c0_i32 = arith.constant 0 : i32
    %c0_i32_0 = arith.constant 0 : i32
    %c0_i32_1 = arith.constant 0 : i32
    return %c0_i32, %c0_i32_0 : i32, i32
  }
  func.func @transform_5(%arg0: i32) -> (i32, i32) {
    %c0_i32 = arith.constant 0 : i32
    %c0_i32_0 = arith.constant 0 : i32
    %c0_i32_1 = arith.constant 0 : i32
    return %c0_i32, %c0_i32_0 : i32, i32
  }
  func.func @transform_6(%arg0: i32) -> (i32, i32) {
    %c0_i32 = arith.constant 0 : i32
    %c0_i32_0 = arith.constant 0 : i32
    %c0_i32_1 = arith.constant 0 : i32
    return %c0_i32, %c0_i32_0 : i32, i32
  }
  func.func @transform_7(%arg0: i32) -> (i32, i32, i32) {
    %c0_i32 = arith.constant 0 : i32
    %c0_i32_0 = arith.constant 0 : i32
    %c0_i32_1 = arith.constant 0 : i32
    return %arg0, %c0_i32, %c0_i32_0 : i32, i32, i32
  }
}

</mosaic_0001>

<llo_original>
// kernel: tpu_custom_call.1
$region0: #{tpu_custom_call.1}
  #allocation0 [shape = 'u32[]', space=smem, size = 0x4, offset = 0x4, fixed_abs, tag = 'smem constant byte address 0x4 - core index']
  #allocation1 [shape = 'u32[72,128]{1,0:T(1,128)}', space=vmem, size = 0x9000, scoped, tag = 'internal scratch']
  #allocation2 [shape = 'f32[1,1]{1,0:T(1,128)S(6)}', space=smem, size = 0x200, scoped, tag = 'scoped memory for tpu_custom_call.1']
  %s0 = inlined_call_operand.hbm [shape: f32[8,32], index: 0, kind: input, shape index: {}]
  %s1 = inlined_call_operand.hbm [shape: bf16[32,128], index: 1, kind: input, shape index: {}]
  %s2 = inlined_call_operand.vmem [shape: f32[1,128], index: 2, kind: input, shape index: {}]
  %s3 = inlined_call_operand.hbm [shape: bf16[128,128], index: 3, kind: input, shape index: {}]
  %s4 = inlined_call_operand.vmem [shape: f32[1,128], index: 4, kind: input, shape index: {}]
  %s5 = inlined_call_operand.vmem [shape: f32[1,128], index: 5, kind: input, shape index: {}]
  %s6 = inlined_call_operand.<no memory space> [shape: f32[1,1], index: 6, kind: input, shape index: {}]
  %s7 = inlined_call_operand.hbm [shape: f32[1,1,8], index: 7, kind: output, shape index: {}]
  %s8 = sld [smem:[#allocation0]]
  $region50: #{tpu_custom_call.1} parent=0
    _
  %s10 = ssub.s32 1, %s8
  %s11 = scalar_select 0, %s10, %s8
  %12 = sst [smem:[#allocation2]] %s6
  $region1: #{tpu_custom_call.1} parent=0
    #allocation3 [shape = 'u8[4096]{0}', space=vmem, size = 0x1000, scoped, tag = 'input window, operand 0, single buffered']
    #allocation4 [shape = 's32[1]{0}', space=sflag, size = 0x4, scoped, tag = 'scoped memory for tpu_custom_call.1']
    #allocation5 [shape = 's32[1]{0}', space=sflag, size = 0x4, scoped, tag = 'scoped memory for tpu_custom_call.1']
    #allocation6 [shape = 'u8[8192]{0}', space=vmem, size = 0x2000, scoped, tag = 'input window, operand 1, single buffered']
    #allocation7 [shape = 's32[1]{0}', space=sflag, size = 0x4, scoped, tag = 'scoped memory for tpu_custom_call.1']
    #allocation8 [shape = 'u8[32768]{0}', space=vmem, size = 0x8000, scoped, tag = 'input window, operand 3, single buffered']
    #allocation9 [shape = 'u8[512]{0}', space=vmem, size = 0x400, scoped, tag = 'output window, operand 0, single buffered']
    %13 = vsyncpa [#allocation4], 0
    %14 = vsyncpa [#allocation7], 0
    %15 = vsyncpa [#allocation5], 0
    // Predicated region
    $region2: #{tpu_custom_call.1} parent=1 // pred_check
      _
    $region3: #{tpu_custom_call.1} parent=1 // pred_check_branch
      %17 = sbr.rel (0) target = $region5
    $region4: #{tpu_custom_call.1} parent=1 // pred_region
      %19 = vsyncadd [#allocation4], 0
      %s21 = sshll.u32 %s0, 4
      %s22 = int_to_ptr.hbm [resolvable:$true] %s21
      %s23 = sshll.u32 [#allocation3], 4
      %s24 = int_to_ptr.vmem [resolvable:$true] %s23
      %26 = dma.hbm_to_vmem [thread:$0]  %s22, 128, %s24, [#allocation4]
    $region5: #{tpu_custom_call.1} parent=1 // pred_fallthru
      _
    // Predicated region
    $region6: #{tpu_custom_call.1} parent=1 // pred_check
      _
    $region7: #{tpu_custom_call.1} parent=1 // pred_check_branch
      %28 = sbr.rel (0) target = $region9
    $region8: #{tpu_custom_call.1} parent=1 // pred_region
      %30 = vsyncadd [#allocation7], 0
      %s31 = sshll.u32 %s1, 4
      %s32 = int_to_ptr.hbm [resolvable:$true] %s31
      %s33 = sshll.u32 [#allocation6], 4
      %s34 = int_to_ptr.vmem [resolvable:$true] %s33
      %39 = dma.hbm_to_vmem [thread:$0]  %s32, 256, %s34, [#allocation7], 64, 64, 4
    $region9: #{tpu_custom_call.1} parent=1 // pred_fallthru
      _
    // Predicated region
    $region10: #{tpu_custom_call.1} parent=1 // pred_check
      _
    $region11: #{tpu_custom_call.1} parent=1 // pred_check_branch
      %41 = sbr.rel (0) target = $region13
    $region12: #{tpu_custom_call.1} parent=1 // pred_region
      _
    $region13: #{tpu_custom_call.1} parent=1 // pred_fallthru
      _
    // Predicated region
    $region14: #{tpu_custom_call.1} parent=1 // pred_check
      _
    $region15: #{tpu_custom_call.1} parent=1 // pred_check_branch
      %43 = sbr.rel (0) target = $region17
    $region16: #{tpu_custom_call.1} parent=1 // pred_region
      %45 = vsyncadd [#allocation7], 0
      %s46 = sshll.u32 %s3, 4
      %s47 = int_to_ptr.hbm [resolvable:$true] %s46
      %s48 = sshll.u32 [#allocation8], 4
      %s49 = int_to_ptr.vmem [resolvable:$true] %s48
      %54 = dma.hbm_to_vmem [thread:$0]  %s47, 1024, %s49, [#allocation7], 64, 64, 4
    $region17: #{tpu_custom_call.1} parent=1 // pred_fallthru
      _
    // Predicated region
    $region18: #{tpu_custom_call.1} parent=1 // pred_check
      _
    $region19: #{tpu_custom_call.1} parent=1 // pred_check_branch
      %56 = sbr.rel (0) target = $region21
    $region20: #{tpu_custom_call.1} parent=1 // pred_region
      _
    $region21: #{tpu_custom_call.1} parent=1 // pred_fallthru
      _
    // Predicated region
    $region22: #{tpu_custom_call.1} parent=1 // pred_check
      _
    $region23: #{tpu_custom_call.1} parent=1 // pred_check_branch
      %58 = sbr.rel (0) target = $region25
    $region24: #{tpu_custom_call.1} parent=1 // pred_region
      _
    $region25: #{tpu_custom_call.1} parent=1 // pred_fallthru
      _
    // Predicated region
    $region26: #{tpu_custom_call.1} parent=1 // pred_check
      _
    $region27: #{tpu_custom_call.1} parent=1 // pred_check_branch
      %60 = sbr.rel (0) target = $region29
    $region28: #{tpu_custom_call.1} parent=1 // pred_region
      _
    $region29: #{tpu_custom_call.1} parent=1 // pred_fallthru
      _
    // Predicated region
    $region30: #{tpu_custom_call.1} parent=1 // pred_check
      _
    $region31: #{tpu_custom_call.1} parent=1 // pred_check_branch
      %62 = sbr.rel (0) target = $region33
    $region32: #{tpu_custom_call.1} parent=1 // pred_region
      %64 = dma.done [#allocation4], 128
    $region33: #{tpu_custom_call.1} parent=1 // pred_fallthru
      _
    // Predicated region
    $region34: #{tpu_custom_call.1} parent=1 // pred_check
      _
    $region35: #{tpu_custom_call.1} parent=1 // pred_check_branch
      %66 = sbr.rel (0) target = $region37
    $region36: #{tpu_custom_call.1} parent=1 // pred_region
      %68 = dma.done [#allocation7], 256
    $region37: #{tpu_custom_call.1} parent=1 // pred_fallthru
      _
    // Predicated region
    $region38: #{tpu_custom_call.1} parent=1 // pred_check
      _
    $region39: #{tpu_custom_call.1} parent=1 // pred_check_branch
      %70 = sbr.rel (0) target = $region41
    $region40: #{tpu_custom_call.1} parent=1 // pred_region
      %72 = dma.done [#allocation7], 1024
    $region41: #{tpu_custom_call.1} parent=1 // pred_fallthru
      _
    %v74 = vld [vmem:[#allocation3] sm:$0xff]
    %v75 = vpack.c.bf16 %v74, %v74
    %v76 = vld [vmem:[#allocation6] sm:$0xf]
    %v77 = vld [vmem:[#allocation6 + $0x4] sm:$0xf]
    %v78 = vld [vmem:[#allocation6 + $0x8] sm:$0xf]
    %v79 = vld [vmem:[#allocation6 + $0xc] sm:$0xf]
    %v80 = vld [vmem:[%s2] sm:$0x1]
    %v82 = vperm.slane %v80, 0
    %v88 = vunpack.c.l.b16 %v76
    %v89 = vunpack.c.l.b16 %v77
    %v90 = vunpack.c.l.b16 %v78
    %v91 = vunpack.c.l.b16 %v79
    %v92 = vpack.c.b16 %v89, %v88
    %v93 = vpack.c.b16 %v91, %v90
    %vm96 = vcmask 261120
    %v98 = vsel %vm96, %v75, 0
    %100 = vmatpush.bf16.msra.mxu0 0
    %101 = vmatpush.bf16.msra.mxu0 0
    %102 = vmatpush.bf16.msra.mxu0 0
    %103 = vmatpush.bf16.msra.mxu0 0
    %104 = vmatpush.bf16.msra.mxu0 0
    %105 = vmatpush.bf16.msra.mxu0 0
    %106 = vmatpush.bf16.msra.mxu0 %v93
    %107 = vmatpush.bf16.msra.mxu0 %v92
    %108 = vmatmul.bf16.gmra.mxu0 %v98
    %v109 = vpop.f32.mrf.mxu0
    %v110 = vadd.f32 %v82, %v109
    %v111 = vpop.f32.mrf.mxu0
    %112 = vdwg.mxu0
    %v113 = vmax.f32 %v110, 0.0
    %v114 = vpack.c.bf16 %v113, %v113
    %v115 = vld [vmem:[#allocation8] sm:$0xf]
    %v116 = vld [vmem:[#allocation8 + $0x4] sm:$0xf]
    %v117 = vld [vmem:[#allocation8 + $0x8] sm:$0xf]
    %v118 = vld [vmem:[#allocation8 + $0xc] sm:$0xf]
    %v119 = vld [vmem:[#allocation8 + $0x10] sm:$0xf]
    %v120 = vld [vmem:[#allocation8 + $0x14] sm:$0xf]
    %v121 = vld [vmem:[#allocation8 + $0x18] sm:$0xf]
    %v122 = vld [vmem:[#allocation8 + $0x1c] sm:$0xf]
    %v123 = vld [vmem:[#allocation8 + $0x20] sm:$0xf]
    %v124 = vld [vmem:[#allocation8 + $0x24] sm:$0xf]
    %v125 = vld [vmem:[#allocation8 + $0x28] sm:$0xf]
    %v126 = vld [vmem:[#allocation8 + $0x2c] sm:$0xf]
    %v127 = vld [vmem:[#allocation8 + $0x30] sm:$0xf]
    %v128 = vld [vmem:[#allocation8 + $0x34] sm:$0xf]
    %v129 = vld [vmem:[#allocation8 + $0x38] sm:$0xf]
    %v130 = vld [vmem:[#allocation8 + $0x3c] sm:$0xf]
    %v131 = vld [vmem:[%s4] sm:$0x1]
    %v133 = vperm.slane %v131, 0
    %v151 = vunpack.c.l.b16 %v115
    %v152 = vunpack.c.l.b16 %v116
    %v153 = vunpack.c.l.b16 %v117
    %v154 = vunpack.c.l.b16 %v118
    %v155 = vunpack.c.l.b16 %v119
    %v156 = vunpack.c.l.b16 %v120
    %v157 = vunpack.c.l.b16 %v121
    %v158 = vunpack.c.l.b16 %v122
    %v159 = vunpack.c.l.b16 %v123
    %v160 = vunpack.c.l.b16 %v124
    %v161 = vunpack.c.l.b16 %v125
    %v162 = vunpack.c.l.b16 %v126
    %v163 = vunpack.c.l.b16 %v127
    %v164 = vunpack.c.l.b16 %v128
    %v165 = vunpack.c.l.b16 %v129
    %v166 = vunpack.c.l.b16 %v130
    %v167 = vpack.c.b16 %v152, %v151
    %v168 = vpack.c.b16 %v154, %v153
    %v169 = vpack.c.b16 %v156, %v155
    %v170 = vpack.c.b16 %v158, %v157
    %v171 = vpack.c.b16 %v160, %v159
    %v172 = vpack.c.b16 %v162, %v161
    %v173 = vpack.c.b16 %v164, %v163
    %v174 = vpack.c.b16 %v166, %v165
    %183 = vmatpush.bf16.msra.mxu0 %v174
    %184 = vmatpush.bf16.msra.mxu0 %v173
    %185 = vmatpush.bf16.msra.mxu0 %v172
    %186 = vmatpush.bf16.msra.mxu0 %v171
    %187 = vmatpush.bf16.msra.mxu0 %v170
    %188 = vmatpush.bf16.msra.mxu0 %v169
    %189 = vmatpush.bf16.msra.mxu0 %v168
    %190 = vmatpush.bf16.msra.mxu0 %v167
    %191 = vmatmul.bf16.gmra.mxu0 %v114
    %v192 = vpop.f32.mrf.mxu0
    %v193 = vadd.f32 %v133, %v192
    %v194 = vpop.f32.mrf.mxu0
    %195 = vdwg.mxu0
    %v196 = vmax.f32 %v193, 0.0
    %v197 = vld [vmem:[%s5] sm:$0x1]
    %s198 = sld [smem:[#allocation2]]
    %v199 = vstv %s198
    %200 = vmatpush.xpose.msra.mxu0 0.0
    %201 = vmatpush.xpose.msra.mxu0 0.0
    %202 = vmatpush.xpose.msra.mxu0 0.0
    %203 = vmatpush.xpose.msra.mxu0 0.0
    %204 = vmatpush.xpose.msra.mxu0 0.0
    %205 = vmatpush.xpose.msra.mxu0 0.0
    %206 = vmatpush.xpose.msra.mxu0 0.0
    %207 = vmatpush.xpose.msra.mxu0 0.0
    %208 = vmatpush.xpose.msra.mxu0 0.0
    %209 = vmatpush.xpose.msra.mxu0 0.0
    %210 = vmatpush.xpose.msra.mxu0 0.0
    %211 = vmatpush.xpose.msra.mxu0 0.0
    %212 = vmatpush.xpose.msra.mxu0 0.0
    %213 = vmatpush.xpose.msra.mxu0 0.0
    %214 = vmatpush.xpose.msra.mxu0 0.0
    %215 = vmatpush.xpose.msra.mxu0 %v196
    %216 = vmatmul.f32.gmra.mxu0 %v197
    %v217 = vpop.f32.mrf.mxu0
    %v218 = vadd.f32 %v199, %v217
    %219 = vdwg.mxu0
    %vm220 = vcmask 57344
    %221 = vst.msk [vmem:[#allocation9] sm:$0x1] %vm220, %v218
    // Predicated region
    $region42: #{tpu_custom_call.1} parent=1 // pred_check
      _
    $region43: #{tpu_custom_call.1} parent=1 // pred_check_branch
      %223 = sbr.rel (0) target = $region45
    $region44: #{tpu_custom_call.1} parent=1 // pred_region
      %225 = vsyncadd [#allocation5], 0
      %s227 = sshll.u32 [#allocation9], 4
      %s228 = int_to_ptr.vmem [resolvable:$true] %s227
      %s229 = sshll.u32 %s7, 4
      %s230 = int_to_ptr.hbm [resolvable:$true] %s229
      %232 = dma.vmem_to_hbm [thread:$0]  %s228, 16, %s230, [#allocation5]
    $region45: #{tpu_custom_call.1} parent=1 // pred_fallthru
      _
    // Predicated region
    $region46: #{tpu_custom_call.1} parent=1 // pred_check
      _
    $region47: #{tpu_custom_call.1} parent=1 // pred_check_branch
      %234 = sbr.rel (0) target = $region49
    $region48: #{tpu_custom_call.1} parent=1 // pred_region
      %236 = dma.done [#allocation5], 16
    $region49: #{tpu_custom_call.1} parent=1 // pred_fallthru
      _
    %237 = vsyncpa [#allocation4], 1
    %238 = vsyncpa [#allocation7], 1
    %239 = vsyncpa [#allocation5], 1

</llo_original>
